<compile_context>
chip_gen: v7x
topology: tpu7x:2x2x1
jax: 0.10.0
libtpu: 0.0.40
codegen_flags: <defaults>
</compile_context>

<pallas_src>
import functools
import numpy as np
import jax
import jax.numpy as jnp
from jax.experimental import pallas as pl
from jax.experimental.pallas import tpu as pltpu


# ----------------------------- Pallas kernel ---------------------------------
def _input_proj_kernel(p_ref, w_ref, b_ref, o_ref, *, neg_slope):
    """One grid step == TM flattened output pixels (rows of the im2col GEMM).

    p_ref: (TM, 9*Cin)   im2col patches
    w_ref: (9*Cin, Cout) conv weight rearranged to (ky, kx, cin) x cout
    b_ref: (1, Cout)     conv bias
    o_ref: (TM, Cout)    projected + activated output rows
    """
    y = jnp.dot(p_ref[...], w_ref[...], preferred_element_type=jnp.float32)
    y = y + b_ref[...]
    # LeakyReLU (negative_slope = 0.01, PyTorch default)
    o_ref[...] = jnp.where(y >= 0, y, neg_slope * y).astype(o_ref.dtype)


# ------------------------------ wrapper ---------------------------------------
def input_proj(x, conv_w, conv_b, *, neg_slope=0.01, tm=256):
    """x: (B, Cin, H, W) f32; conv_w: (Cout, Cin, 3, 3); conv_b: (Cout,).

    Returns (B, H*W, Cout), matching InputProj.forward (norm_layer=None).
    """
    B, Cin, H, W = x.shape
    Cout = conv_w.shape[0]
    K = 9 * Cin

    # --- glue: im2col (layout only, no FLOPs) -------------------------------
    x_nhwc = jnp.transpose(x, (0, 2, 3, 1))                        # (B, H, W, Cin)
    xp = jnp.pad(x_nhwc, ((0, 0), (1, 1), (1, 1), (0, 0)))         # SAME zero pad
    taps = [xp[:, ky:ky + H, kx:kx + W, :]
            for ky in range(3) for kx in range(3)]                 # 9 x (B,H,W,Cin)
    patches = jnp.concatenate(taps, axis=-1).reshape(B * H * W, K)  # (M, 9*Cin)

    # conv weight (Cout, Cin, 3, 3) -> rows ordered (ky, kx, cin) -> (9*Cin, Cout)
    w2 = jnp.transpose(conv_w, (2, 3, 1, 0)).reshape(K, Cout)
    b2 = conv_b.reshape(1, Cout)

    # --- row tiling ----------------------------------------------------------
    M = B * H * W
    tm = min(tm, M)
    Mp = ((M + tm - 1) // tm) * tm
    if Mp != M:
        patches = jnp.pad(patches, ((0, Mp - M), (0, 0)))

    kernel = functools.partial(_input_proj_kernel, neg_slope=float(neg_slope))

    grid_spec = pltpu.PrefetchScalarGridSpec(
        num_scalar_prefetch=0,
        grid=(Mp // tm,),
        in_specs=[
            pl.BlockSpec((tm, K), lambda i: (i, 0)),      # patches (tiled rows)
            pl.BlockSpec((K, Cout), lambda i: (0, 0)),    # weight (resident)
            pl.BlockSpec((1, Cout), lambda i: (0, 0)),    # bias   (resident)
        ],
        out_specs=pl.BlockSpec((tm, Cout), lambda i: (i, 0)),
    )

    out = pl.pallas_call(
        kernel,
        out_shape=jax.ShapeDtypeStruct((Mp, Cout), jnp.float32),
        grid_spec=grid_spec,
        compiler_params=pltpu.CompilerParams(
            dimension_semantics=("parallel",)),
    )(patches, w2, b2)

    return out[:M].reshape(B, H * W, Cout)


# ------------------------------ pure-JAX reference ----------------------------
def reference(x, conv_w, conv_b, *, neg_slope=0.01):
    y = jax.lax.conv_general_dilated(
        x, conv_w, window_strides=(1, 1), padding="SAME",
        dimension_numbers=("NCHW", "OIHW", "NCHW"))
    y = y + conv_b[None, :, None, None]
    y = jnp.where(y >= 0, y, neg_slope * y)
    B, C, H, W = y.shape
    return y.reshape(B, C, H * W).transpose(0, 2, 1)


# ------------------------------- main ------------------------------------------
if __name__ == "__main__":
    # small shapes: batch=2, in_channel=3, spatial 16x16, out_channel=64
    B, Cin, H, W, Cout = 2, 3, 16, 16, 64

    key = jax.random.PRNGKey(0)
    k1, k2, k3 = jax.random.split(key, 3)
    bnd = 1.0 / float(np.sqrt(Cin * 9))
    conv_w = jax.random.uniform(k1, (Cout, Cin, 3, 3), jnp.float32, -bnd, bnd)
    conv_b = jax.random.uniform(k2, (Cout,), jnp.float32, -bnd, bnd)
    x = jax.random.normal(k3, (B, Cin, H, W), jnp.float32)

    out = input_proj(x, conv_w, conv_b)
    out = jax.block_until_ready(out)

    ref = reference(x, conv_w, conv_b)
    assert out.shape == (B, H * W, Cout)
    np.testing.assert_allclose(np.asarray(out), np.asarray(ref), rtol=1e-4, atol=1e-4)

    print("KERNEL_OK")
</pallas_src>

<mosaic_0001>
module attributes {stable_mosaic.version = 11 : i64} {
  func.func @_input_proj_kernel(%arg0: i32, %arg1: memref<256x27xf32, #tpu.memory_space<vmem>>, %arg2: memref<27x64xf32, #tpu.memory_space<vmem>>, %arg3: memref<1x64xf32, #tpu.memory_space<vmem>>, %arg4: memref<256x64xf32, #tpu.memory_space<vmem>>) attributes {dimension_semantics = [#tpu.dimension_semantics<parallel>], iteration_bounds = array<i64: 2>, scalar_prefetch = 0 : i64, scratch_operands = 0 : i64, tpu.core_type = #tpu.core_type<tc>, window_params = [{transform_indices = @transform_0, window_bounds = array<i64: 256, 27>}, {pipeline_mode = #tpu.pipeline_mode<synchronous>, transform_indices = @transform_1, window_bounds = array<i64: 27, 64>}, {pipeline_mode = #tpu.pipeline_mode<synchronous>, transform_indices = @transform_2, window_bounds = array<i64: 1, 64>}, {transform_indices = @transform_3, window_bounds = array<i64: 256, 64>}]} {
    %c0 = arith.constant 0 : index
    %c0_0 = arith.constant 0 : index
    %0 = vector.load %arg1[%c0, %c0_0] : memref<256x27xf32, #tpu.memory_space<vmem>>, vector<256x27xf32>
    %c0_1 = arith.constant 0 : index
    %c0_2 = arith.constant 0 : index
    %1 = vector.load %arg2[%c0_1, %c0_2] : memref<27x64xf32, #tpu.memory_space<vmem>>, vector<27x64xf32>
    %cst = arith.constant dense<0.000000e+00> : vector<256x64xf32>
    %2 = tpu.matmul %0, %1, %cst {dimension_numbers = #tpu.dot_dimension_numbers<[1], [0], [0], [1], [0, 0, 1, 1], [], []>} : vector<256x27xf32>, vector<27x64xf32>, vector<256x64xf32> -> vector<256x64xf32>
    %c0_3 = arith.constant 0 : index
    %c0_4 = arith.constant 0 : index
    %3 = vector.load %arg3[%c0_3, %c0_4] : memref<1x64xf32, #tpu.memory_space<vmem>>, vector<1x64xf32>
    %4 = vector.broadcast %3 : vector<1x64xf32> to vector<256x64xf32>
    %5 = arith.addf %2, %4 : vector<256x64xf32>
    %cst_5 = arith.constant 0.000000e+00 : f32
    %6 = vector.broadcast %cst_5 : f32 to vector<256x64xf32>
    %7 = arith.cmpf oge, %5, %6 : vector<256x64xf32>
    %cst_6 = arith.constant 0.00999999977 : f32
    %8 = vector.broadcast %cst_6 : f32 to vector<256x64xf32>
    %9 = arith.mulf %8, %5 : vector<256x64xf32>
    %10 = arith.select %7, %5, %9 : vector<256x64xi1>, vector<256x64xf32>
    %c0_7 = arith.constant 0 : index
    %c0_8 = arith.constant 0 : index
    %11 = vector.load %arg4[%c0_7, %c0_8] : memref<256x64xf32, #tpu.memory_space<vmem>>, vector<256x64xf32>
    tpu.vector_store %arg4[%c0_7, %c0_8], %10 {strides = array<i32>} : memref<256x64xf32, #tpu.memory_space<vmem>>, vector<256x64xf32>,
    return
  }
  func.func @transform_0(%arg0: i32) -> (i32, i32) {
    %c0_i32 = arith.constant 0 : i32
    %c0_i32_0 = arith.constant 0 : i32
    return %arg0, %c0_i32 : i32, i32
  }
  func.func @transform_1(%arg0: i32) -> (i32, i32) {
    %c0_i32 = arith.constant 0 : i32
    %c0_i32_0 = arith.constant 0 : i32
    %c0_i32_1 = arith.constant 0 : i32
    return %c0_i32, %c0_i32_0 : i32, i32
  }
  func.func @transform_2(%arg0: i32) -> (i32, i32) {
    %c0_i32 = arith.constant 0 : i32
    %c0_i32_0 = arith.constant 0 : i32
    %c0_i32_1 = arith.constant 0 : i32
    return %c0_i32, %c0_i32_0 : i32, i32
  }
  func.func @transform_3(%arg0: i32) -> (i32, i32) {
    %c0_i32 = arith.constant 0 : i32
    %c0_i32_0 = arith.constant 0 : i32
    return %arg0, %c0_i32 : i32, i32
  }
}

</mosaic_0001>

<llo_original>
// kernel: tpu_custom_call.1
$region0: #{tpu_custom_call.1}
  #allocation0 [shape = 'u32[]', space=smem, size = 0x4, offset = 0x4, fixed_abs, tag = 'smem constant byte address 0x4 - core index']
  #allocation1 [shape = 'u32[144,128]{1,0:T(1,128)}', space=vmem, size = 0x12000, scoped, tag = 'internal scratch']
  %s0 = inlined_call_operand.vmem [shape: f32[512,27], index: 0, kind: input, shape index: {}]
  %s1 = inlined_call_operand.vmem [shape: f32[27,64], index: 1, kind: input, shape index: {}]
  %s2 = inlined_call_operand.vmem [shape: f32[1,64], index: 2, kind: input, shape index: {}]
  %s3 = inlined_call_operand.vmem [shape: f32[512,64], index: 3, kind: output, shape index: {}]
  %s4 = sld [smem:[#allocation0]]
  $region45: #{tpu_custom_call.1} parent=0
    _
  %s6 = ssub.s32 1, %s4
  %s7 = scalar_select 0, %s6, %s4
  loop: start=0, step=1, limit=4
  $region2: #{tpu_custom_call.1} parent=0 // loop_pre_header
    _
  $region3: #{tpu_custom_call.1} parent=0 // loop_header
    %s9 = sphi 0, %s13
    %p10 = scmp.ge.s32.totalorder %s9, 4
    %s19 = sphi 0, %s21
    %s22 = sphi 0, %s19
    %s23 = sphi 0, %s22
    %s39 = sphi 0, %s23
    %s43 = sphi 0, %s43
    %s45 = sphi 0, %s43
    %s46 = sphi 0, %s45
    %s60 = sphi 0, %s46
    %s64 = sphi 0, %s64
    %s66 = sphi 0, %s64
    %s67 = sphi 0, %s66
    %s81 = sphi 0, %s67
    %s87 = sphi 0, %s89
    %s90 = sphi 0, %s87
    %s91 = sphi 0, %s90
    %s107 = sphi 0, %s91
  $region4: #{tpu_custom_call.1} parent=0 // loop_header_branch
    %12 = sbr.rel (%p10) target = $region8
  $region5: #{tpu_custom_call.1} parent=0 // loop_body
    %s14 = ssub.s32 %s9, 1
    %s15 = ssub.s32 %s9, 2
    %s16 = sadd.s32 %s9, 1
    %s17 = ssub.s32 %s9, %s16
    %p18 = scmp.eq.s32.totalorder %s17, 0
    %s20 = sadd.s32 %s19, 1
    %s21 = scalar_select %p18, %s19, %s20
    %p24 = pneg %p18
    %p25 = scmp.eq.s32.totalorder %s9, 1
    %p26 = por %p24, %p25
    %p27 = scmp.ne.s32.totalorder %s19, %s22
    %p28 = scmp.eq.s32.totalorder %s9, 0
    %p29 = por %p27, %p28
    %p30 = scmp.ne.s32.totalorder %s19, %s22
    %p31 = scmp.eq.s32.totalorder %s14, 1
    %p32 = por %p30, %p31
    %p33 = scmp.ne.s32.totalorder %s22, %s23
    %p34 = scmp.eq.s32.totalorder %s14, 0
    %p35 = por %p33, %p34
    %p36 = scmp.ne.s32.totalorder %s22, %s23
    %p37 = scmp.eq.s32.totalorder %s15, 1
    %p38 = por %p36, %p37
    %p40 = scmp.ne.s32.totalorder %s23, %s39
    %p41 = scmp.eq.s32.totalorder %s15, 0
    %p42 = por %p40, %p41
    %s44 = sadd.s32 %s43, 1
    %p47 = scmp.eq.s32.totalorder %s9, 1
    %p48 = scmp.ne.s32.totalorder %s43, %s45
    %p49 = scmp.eq.s32.totalorder %s9, 0
    %p50 = por %p48, %p49
    %p51 = scmp.ne.s32.totalorder %s43, %s45
    %p52 = scmp.eq.s32.totalorder %s14, 1
    %p53 = por %p51, %p52
    %p54 = scmp.ne.s32.totalorder %s45, %s46
    %p55 = scmp.eq.s32.totalorder %s14, 0
    %p56 = por %p54, %p55
    %p57 = scmp.ne.s32.totalorder %s45, %s46
    %p58 = scmp.eq.s32.totalorder %s15, 1
    %p59 = por %p57, %p58
    %p61 = scmp.ne.s32.totalorder %s46, %s60
    %p62 = scmp.eq.s32.totalorder %s15, 0
    %p63 = por %p61, %p62
    %s65 = sadd.s32 %s64, 1
    %p68 = scmp.eq.s32.totalorder %s9, 1
    %p69 = scmp.ne.s32.totalorder %s64, %s66
    %p70 = scmp.eq.s32.totalorder %s9, 0
    %p71 = por %p69, %p70
    %p72 = scmp.ne.s32.totalorder %s64, %s66
    %p73 = scmp.eq.s32.totalorder %s14, 1
    %p74 = por %p72, %p73
    %p75 = scmp.ne.s32.totalorder %s66, %s67
    %p76 = scmp.eq.s32.totalorder %s14, 0
    %p77 = por %p75, %p76
    %p78 = scmp.ne.s32.totalorder %s66, %s67
    %p79 = scmp.eq.s32.totalorder %s15, 1
    %p80 = por %p78, %p79
    %p82 = scmp.ne.s32.totalorder %s67, %s81
    %p83 = scmp.eq.s32.totalorder %s15, 0
    %p84 = por %p82, %p83
    %s85 = ssub.s32 %s9, %s16
    %p86 = scmp.eq.s32.totalorder %s85, 0
    %s88 = sadd.s32 %s87, 1
    %s89 = scalar_select %p86, %s87, %s88
    %p92 = pneg %p86
    %p93 = scmp.eq.s32.totalorder %s9, 1
    %p94 = por %p92, %p93
    %p95 = scmp.ne.s32.totalorder %s87, %s90
    %p96 = scmp.eq.s32.totalorder %s9, 0
    %p97 = por %p95, %p96
    %p98 = scmp.ne.s32.totalorder %s87, %s90
    %p99 = scmp.eq.s32.totalorder %s14, 1
    %p100 = por %p98, %p99
    %p101 = scmp.ne.s32.totalorder %s90, %s91
    %p102 = scmp.eq.s32.totalorder %s14, 0
    %p103 = por %p101, %p102
    %p104 = scmp.ne.s32.totalorder %s90, %s91
    %p105 = scmp.eq.s32.totalorder %s15, 1
    %p106 = por %p104, %p105
    %p108 = scmp.ne.s32.totalorder %s91, %s107
    %p109 = scmp.eq.s32.totalorder %s15, 0
    %p110 = por %p108, %p109
    %p111 = scmp.le.s32.totalorder 1, %s9
    %p112 = scmp.lt.s32.totalorder %s9, 3
    %p113 = pnand %p111, %p112
    %p114 = pneg %p113
    // Predicated region
    $region9: #{tpu_custom_call.1} parent=5 // pred_check
      _
    $region10: #{tpu_custom_call.1} parent=5 // pred_check_branch
      %116 = sbr.rel (%p113) target = $region12
    $region11: #{tpu_custom_call.1} parent=5 // pred_region
      %s117 = ssub.s32 %s9, 1
      // Predicated region
      $region13: #{tpu_custom_call.1} parent=11 // pred_check
        %p118 = pneg %p56
      $region14: #{tpu_custom_call.1} parent=11 // pred_check_branch
        %120 = sbr.rel (%p118) target = $region16
      $region15: #{tpu_custom_call.1} parent=11 // pred_region
        _
      $region16: #{tpu_custom_call.1} parent=11 // pred_fallthru
        _
      // Predicated region
      $region17: #{tpu_custom_call.1} parent=11 // pred_check
        %p121 = pneg %p77
      $region18: #{tpu_custom_call.1} parent=11 // pred_check_branch
        %123 = sbr.rel (%p121) target = $region20
      $region19: #{tpu_custom_call.1} parent=11 // pred_region
        _
      $region20: #{tpu_custom_call.1} parent=11 // pred_fallthru
        _
    $region12: #{tpu_custom_call.1} parent=5 // pred_fallthru
      _
    %p124 = scmp.lt.s32.totalorder %s9, 2
    // Predicated region
    $region21: #{tpu_custom_call.1} parent=5 // pred_check
      %p125 = pneg %p124
    $region22: #{tpu_custom_call.1} parent=5 // pred_check_branch
      %127 = sbr.rel (%p125) target = $region24
    $region23: #{tpu_custom_call.1} parent=5 // pred_region
      // Predicated region
      $region25: #{tpu_custom_call.1} parent=23 // pred_check
        %p128 = pneg %p29
      $region26: #{tpu_custom_call.1} parent=23 // pred_check_branch
        %130 = sbr.rel (%p128) target = $region28
      $region27: #{tpu_custom_call.1} parent=23 // pred_region
        %s131 = smul.u32 32, %s9
        %p132 = scmp.lt.s32.totalorder %s131, 63
        %s133 = scalar_select %p132, %s131, 63
        %s134 = smul.addr %s133, 8
        %s135 = scalar_lea.vmem %s0, %s134
        %s136 = smul.u32 32, %s9
      $region28: #{tpu_custom_call.1} parent=23 // pred_fallthru
        _
    $region24: #{tpu_custom_call.1} parent=5 // pred_fallthru
      _
    %p137 = scmp.le.s32.totalorder 1, %s9
    %p138 = scmp.lt.s32.totalorder %s9, 3
    %p139 = pnand %p137, %p138
    %p140 = pneg %p139
    // Predicated region
    $region29: #{tpu_custom_call.1} parent=5 // pred_check
      _
    $region30: #{tpu_custom_call.1} parent=5 // pred_check_branch
      %142 = sbr.rel (%p139) target = $region32
    $region31: #{tpu_custom_call.1} parent=5 // pred_region
      %s143 = ssub.s32 %s9, 1
      %s144 = smul.u32 32, %s14
      %p145 = scmp.lt.s32.totalorder %s144, 63
      %s146 = scalar_select %p145, %s144, 63
      %s147 = smul.addr %s146, 8
      %s148 = scalar_lea.vmem %s0, %s147
      %p149 = pneg %p35
      %p150 = pneg %p32
      %p151 = pneg %p56
      %p152 = pneg %p53
      %p153 = pneg %p77
      %p154 = pneg %p74
      %p155 = pneg %p103
      %p156 = pneg %p100
      %s157 = smul.u32 32, %s14
      %p158 = scmp.lt.s32.totalorder %s157, 63
      %s159 = scalar_select %p158, %s157, 63
      %s160 = smul.addr %s159, 8
      %s161 = scalar_lea.vmem %s3, %s160
      %s162 = smul.u32 32, %s14
      %p163 = scmp.lt.s32.totalorder %s162, 63
      %s164 = scalar_select %p163, %s162, 63
      %s165 = smul.addr %s164, 8
      %s166 = scalar_lea.vmem %s0, %s165
      %s167 = smul.u32 32, %s14
      %s168 = smul.u32 32, %s14
      %p169 = scmp.lt.s32.totalorder %s168, 63
      %s170 = scalar_select %p169, %s168, 63
      %s171 = smul.addr %s170, 8
      %s172 = scalar_lea.vmem %s3, %s171
      %s173 = smul.u32 32, %s14
      %v174 = vld [vmem:[%s166] sm:$0xff]
      %v175 = vld [vmem:[%s166 + $0x8] sm:$0xff]
      %v176 = vld [vmem:[%s166 + $0x10] sm:$0xff]
      %v177 = vld [vmem:[%s166 + $0x18] sm:$0xff]
      %v178 = vld [vmem:[%s166 + $0x20] sm:$0xff]
      %v179 = vld [vmem:[%s166 + $0x28] sm:$0xff]
      %v180 = vld [vmem:[%s166 + $0x30] sm:$0xff]
      %v181 = vld [vmem:[%s166 + $0x38] sm:$0xff]
      %v182 = vld [vmem:[%s166 + $0x40] sm:$0xff]
      %v183 = vld [vmem:[%s166 + $0x48] sm:$0xff]
      %v184 = vld [vmem:[%s166 + $0x50] sm:$0xff]
      %v185 = vld [vmem:[%s166 + $0x58] sm:$0xff]
      %v186 = vld [vmem:[%s166 + $0x60] sm:$0xff]
      %v187 = vld [vmem:[%s166 + $0x68] sm:$0xff]
      %v188 = vld [vmem:[%s166 + $0x70] sm:$0xff]
      %v189 = vld [vmem:[%s166 + $0x78] sm:$0xff]
      %v190 = vld [vmem:[%s166 + $0x80] sm:$0xff]
      %v191 = vld [vmem:[%s166 + $0x88] sm:$0xff]
      %v192 = vld [vmem:[%s166 + $0x90] sm:$0xff]
      %v193 = vld [vmem:[%s166 + $0x98] sm:$0xff]
      %v194 = vld [vmem:[%s166 + $0xa0] sm:$0xff]
      %v195 = vld [vmem:[%s166 + $0xa8] sm:$0xff]
      %v196 = vld [vmem:[%s166 + $0xb0] sm:$0xff]
      %v197 = vld [vmem:[%s166 + $0xb8] sm:$0xff]
      %v198 = vld [vmem:[%s166 + $0xc0] sm:$0xff]
      %v199 = vld [vmem:[%s166 + $0xc8] sm:$0xff]
      %v200 = vld [vmem:[%s166 + $0xd0] sm:$0xff]
      %v201 = vld [vmem:[%s166 + $0xd8] sm:$0xff]
      %v202 = vld [vmem:[%s166 + $0xe0] sm:$0xff]
      %v203 = vld [vmem:[%s166 + $0xe8] sm:$0xff]
      %v204 = vld [vmem:[%s166 + $0xf0] sm:$0xff]
      %v205 = vld [vmem:[%s166 + $0xf8] sm:$0xff]
      %v206 = vld [vmem:[%s1] sm:$0xff]
      %v207 = vld [vmem:[%s1 + $0x8] sm:$0xff]
      %v208 = vld [vmem:[%s1 + $0x10] sm:$0xff]
      %v209 = vld [vmem:[%s1 + $0x18] sm:$0x7]
      %v210 = vld [vmem:[%s2] sm:$0x1]
      %v212 = vlaneseq
      %v213 = vshrl.u32 %v212, 7
      %v214 = vsub.s32 0, %v213
      %v215 = vrot.slane %v210, %v214
      %vm217 = vcmask 220160
      %v219 = vsel %vm217, %v174, 0
      %v222 = vsel %vm217, %v175, 0
      %v225 = vsel %vm217, %v176, 0
      %v228 = vsel %vm217, %v177, 0
      %v231 = vsel %vm217, %v178, 0
      %v234 = vsel %vm217, %v179, 0
      %v237 = vsel %vm217, %v180, 0
      %v240 = vsel %vm217, %v181, 0
      %v243 = vsel %vm217, %v182, 0
      %v246 = vsel %vm217, %v183, 0
      %v249 = vsel %vm217, %v184, 0
      %v252 = vsel %vm217, %v185, 0
      %v255 = vsel %vm217, %v186, 0
      %v258 = vsel %vm217, %v187, 0
      %v261 = vsel %vm217, %v188, 0
      %v264 = vsel %vm217, %v189, 0
      %v267 = vsel %vm217, %v190, 0
      %v270 = vsel %vm217, %v191, 0
      %v273 = vsel %vm217, %v192, 0
      %v276 = vsel %vm217, %v193, 0
      %v279 = vsel %vm217, %v194, 0
      %v282 = vsel %vm217, %v195, 0
      %v285 = vsel %vm217, %v196, 0
      %v288 = vsel %vm217, %v197, 0
      %v291 = vsel %vm217, %v198, 0
      %v294 = vsel %vm217, %v199, 0
      %v297 = vsel %vm217, %v200, 0
      %v300 = vsel %vm217, %v201, 0
      %v303 = vsel %vm217, %v202, 0
      %v306 = vsel %vm217, %v203, 0
      %v309 = vsel %vm217, %v204, 0
      %v312 = vsel %vm217, %v205, 0
      %vm314 = vcmask 1042432
      %v316 = vsel %vm314, %v209, 0
      %318 = vmatprep.subr.mxu0 0.0
      %319 = vmatpush1.msra.mxu0 %v206
      %320 = vmatprep.subr.mxu0 0.0
      %321 = vmatpush1.msra.mxu0 %v207
      %322 = vmatprep.subr.mxu0 0.0
      %323 = vmatpush1.msra.mxu0 %v208
      %324 = vmatprep.subr.mxu0 0.0
      %325 = vmatpush1.msra.mxu0 %v316
      %326 = vmatprep.subr.mxu0 0.0
      %327 = vmatpush1.msra.mxu0 0.0
      %328 = vmatprep.subr.mxu0 0.0
      %329 = vmatpush1.msra.mxu0 0.0
      %330 = vmatprep.subr.mxu0 0.0
      %331 = vmatpush1.msra.mxu0 0.0
      %332 = vmatprep.subr.mxu0 0.0
      %333 = vmatpush1.msra.mxu0 0.0
      %334 = vmatprep.subr.mxu0 0.0
      %335 = vmatpush1.msra.mxu0 0.0
      %336 = vmatprep.subr.mxu0 0.0
      %337 = vmatpush1.msra.mxu0 0.0
      %338 = vmatprep.subr.mxu0 0.0
      %339 = vmatpush1.msra.mxu0 0.0
      %340 = vmatprep.subr.mxu0 0.0
      %341 = vmatpush1.msra.mxu0 0.0
      %342 = vmatprep.subr.mxu0 0.0
      %343 = vmatpush1.msra.mxu0 0.0
      %344 = vmatprep.subr.mxu0 0.0
      %345 = vmatpush1.msra.mxu0 0.0
      %346 = vmatprep.subr.mxu0 0.0
      %347 = vmatpush1.msra.mxu0 0.0
      %348 = vmatprep.subr.mxu0 0.0
      %349 = vmatpush1.msra.mxu0 0.0
      %350 = vmatprep.subr.mxu0 0.0
      %351 = vmatpush1.msra.mxu0 0.0
      %352 = vmatprep.subr.mxu0 0.0
      %353 = vmatpush1.msra.mxu0 0.0
      %354 = vmatprep.subr.mxu0 0.0
      %355 = vmatpush1.msra.mxu0 0.0
      %356 = vmatprep.subr.mxu0 0.0
      %357 = vmatpush1.msra.mxu0 0.0
      %358 = vmatprep.subr.mxu0 0.0
      %359 = vmatpush1.msra.mxu0 0.0
      %360 = vmatprep.subr.mxu0 0.0
      %361 = vmatpush1.msra.mxu0 0.0
      %362 = vmatprep.subr.mxu0 0.0
      %363 = vmatpush1.msra.mxu0 0.0
      %364 = vmatprep.subr.mxu0 0.0
      %365 = vmatpush1.msra.mxu0 0.0
      %366 = vmatprep.subr.mxu0 0.0
      %367 = vmatpush1.msra.mxu0 0.0
      %368 = vmatprep.subr.mxu0 0.0
      %369 = vmatpush1.msra.mxu0 0.0
      %370 = vmatprep.subr.mxu0 0.0
      %371 = vmatpush1.msra.mxu0 0.0
      %372 = vmatprep.subr.mxu0 0.0
      %373 = vmatpush1.msra.mxu0 0.0
      %374 = vmatprep.subr.mxu0 0.0
      %375 = vmatpush1.msra.mxu0 0.0
      %376 = vmatprep.subr.mxu0 0.0
      %377 = vmatpush1.msra.mxu0 0.0
      %378 = vmatprep.subr.mxu0 0.0
      %379 = vmatpush1.msra.mxu0 0.0
      %380 = vmatprep.subr.mxu0 0.0
      %381 = vmatpush1.msra.mxu0 0.0
      %382 = vmatprep.mubr.f32.mxu0 0.0
      %383 = vmatmul.mubr.f32.gmra.mrb[0].mxu0 %v219
      %v384 = vpop.f32.mrb[0].mxu0
      %v385 = vadd.f32 %v215, %v384
      %v386 = vpop.f32.mrb[0].mxu0
      %387 = vmatprep.mubr.f32.mxu0 0.0
      %388 = vmatmul.mubr.f32.gmra.mrb[0].mxu0 %v222
      %v389 = vpop.f32.mrb[0].mxu0
      %v390 = vadd.f32 %v215, %v389
      %v391 = vpop.f32.mrb[0].mxu0
      %392 = vmatprep.mubr.f32.mxu0 0.0
      %393 = vmatmul.mubr.f32.gmra.mrb[0].mxu0 %v225
      %v394 = vpop.f32.mrb[0].mxu0
      %v395 = vadd.f32 %v215, %v394
      %v396 = vpop.f32.mrb[0].mxu0
      %397 = vmatprep.mubr.f32.mxu0 0.0
      %398 = vmatmul.mubr.f32.gmra.mrb[0].mxu0 %v228
      %v399 = vpop.f32.mrb[0].mxu0
      %v400 = vadd.f32 %v215, %v399
      %v401 = vpop.f32.mrb[0].mxu0
      %402 = vmatprep.mubr.f32.mxu0 0.0
      %403 = vmatmul.mubr.f32.gmra.mrb[0].mxu0 %v231
      %v404 = vpop.f32.mrb[0].mxu0
      %v405 = vadd.f32 %v215, %v404
      %v406 = vpop.f32.mrb[0].mxu0
      %407 = vmatprep.mubr.f32.mxu0 0.0
      %408 = vmatmul.mubr.f32.gmra.mrb[0].mxu0 %v234
      %v409 = vpop.f32.mrb[0].mxu0
      %v410 = vadd.f32 %v215, %v409
      %v411 = vpop.f32.mrb[0].mxu0
      %412 = vmatprep.mubr.f32.mxu0 0.0
      %413 = vmatmul.mubr.f32.gmra.mrb[0].mxu0 %v237
      %v414 = vpop.f32.mrb[0].mxu0
      %v415 = vadd.f32 %v215, %v414
      %v416 = vpop.f32.mrb[0].mxu0
      %417 = vmatprep.mubr.f32.mxu0 0.0
      %418 = vmatmul.mubr.f32.gmra.mrb[0].mxu0 %v240
      %v419 = vpop.f32.mrb[0].mxu0
      %v420 = vadd.f32 %v215, %v419
      %v421 = vpop.f32.mrb[0].mxu0
      %422 = vmatprep.mubr.f32.mxu0 0.0
      %423 = vmatmul.mubr.f32.gmra.mrb[0].mxu0 %v243
      %v424 = vpop.f32.mrb[0].mxu0
      %v425 = vadd.f32 %v215, %v424
      %v426 = vpop.f32.mrb[0].mxu0
      %427 = vmatprep.mubr.f32.mxu0 0.0
      %428 = vmatmul.mubr.f32.gmra.mrb[0].mxu0 %v246
      %v429 = vpop.f32.mrb[0].mxu0
      %v430 = vadd.f32 %v215, %v429
      %v431 = vpop.f32.mrb[0].mxu0
      %432 = vmatprep.mubr.f32.mxu0 0.0
      %433 = vmatmul.mubr.f32.gmra.mrb[0].mxu0 %v249
      %v434 = vpop.f32.mrb[0].mxu0
      %v435 = vadd.f32 %v215, %v434
      %v436 = vpop.f32.mrb[0].mxu0
      %437 = vmatprep.mubr.f32.mxu0 0.0
      %438 = vmatmul.mubr.f32.gmra.mrb[0].mxu0 %v252
      %v439 = vpop.f32.mrb[0].mxu0
      %v440 = vadd.f32 %v215, %v439
      %v441 = vpop.f32.mrb[0].mxu0
      %442 = vmatprep.mubr.f32.mxu0 0.0
      %443 = vmatmul.mubr.f32.gmra.mrb[0].mxu0 %v255
      %v444 = vpop.f32.mrb[0].mxu0
      %v445 = vadd.f32 %v215, %v444
      %v446 = vpop.f32.mrb[0].mxu0
      %447 = vmatprep.mubr.f32.mxu0 0.0
      %448 = vmatmul.mubr.f32.gmra.mrb[0].mxu0 %v258
      %v449 = vpop.f32.mrb[0].mxu0
      %v450 = vadd.f32 %v215, %v449
      %v451 = vpop.f32.mrb[0].mxu0
      %452 = vmatprep.mubr.f32.mxu0 0.0
      %453 = vmatmul.mubr.f32.gmra.mrb[0].mxu0 %v261
      %v454 = vpop.f32.mrb[0].mxu0
      %v455 = vadd.f32 %v215, %v454
      %v456 = vpop.f32.mrb[0].mxu0
      %457 = vmatprep.mubr.f32.mxu0 0.0
      %458 = vmatmul.mubr.f32.gmra.mrb[0].mxu0 %v264
      %v459 = vpop.f32.mrb[0].mxu0
      %v460 = vadd.f32 %v215, %v459
      %v461 = vpop.f32.mrb[0].mxu0
      %462 = vmatprep.mubr.f32.mxu0 0.0
      %463 = vmatmul.mubr.f32.gmra.mrb[0].mxu0 %v267
      %v464 = vpop.f32.mrb[0].mxu0
      %v465 = vadd.f32 %v215, %v464
      %v466 = vpop.f32.mrb[0].mxu0
      %467 = vmatprep.mubr.f32.mxu0 0.0
      %468 = vmatmul.mubr.f32.gmra.mrb[0].mxu0 %v270
      %v469 = vpop.f32.mrb[0].mxu0
      %v470 = vadd.f32 %v215, %v469
      %v471 = vpop.f32.mrb[0].mxu0
      %472 = vmatprep.mubr.f32.mxu0 0.0
      %473 = vmatmul.mubr.f32.gmra.mrb[0].mxu0 %v273
      %v474 = vpop.f32.mrb[0].mxu0
      %v475 = vadd.f32 %v215, %v474
      %v476 = vpop.f32.mrb[0].mxu0
      %477 = vmatprep.mubr.f32.mxu0 0.0
      %478 = vmatmul.mubr.f32.gmra.mrb[0].mxu0 %v276
      %v479 = vpop.f32.mrb[0].mxu0
      %v480 = vadd.f32 %v215, %v479
      %v481 = vpop.f32.mrb[0].mxu0
      %482 = vmatprep.mubr.f32.mxu0 0.0
      %483 = vmatmul.mubr.f32.gmra.mrb[0].mxu0 %v279
      %v484 = vpop.f32.mrb[0].mxu0
      %v485 = vadd.f32 %v215, %v484
      %v486 = vpop.f32.mrb[0].mxu0
      %487 = vmatprep.mubr.f32.mxu0 0.0
      %488 = vmatmul.mubr.f32.gmra.mrb[0].mxu0 %v282
      %v489 = vpop.f32.mrb[0].mxu0
      %v490 = vadd.f32 %v215, %v489
      %v491 = vpop.f32.mrb[0].mxu0
      %492 = vmatprep.mubr.f32.mxu0 0.0
      %493 = vmatmul.mubr.f32.gmra.mrb[0].mxu0 %v285
      %v494 = vpop.f32.mrb[0].mxu0
      %v495 = vadd.f32 %v215, %v494
      %v496 = vpop.f32.mrb[0].mxu0
      %497 = vmatprep.mubr.f32.mxu0 0.0
      %498 = vmatmul.mubr.f32.gmra.mrb[0].mxu0 %v288
      %v499 = vpop.f32.mrb[0].mxu0
      %v500 = vadd.f32 %v215, %v499
      %v501 = vpop.f32.mrb[0].mxu0
      %502 = vmatprep.mubr.f32.mxu0 0.0
      %503 = vmatmul.mubr.f32.gmra.mrb[0].mxu0 %v291
      %v504 = vpop.f32.mrb[0].mxu0
      %v505 = vadd.f32 %v215, %v504
      %v506 = vpop.f32.mrb[0].mxu0
      %507 = vmatprep.mubr.f32.mxu0 0.0
      %508 = vmatmul.mubr.f32.gmra.mrb[0].mxu0 %v294
      %v509 = vpop.f32.mrb[0].mxu0
      %v510 = vadd.f32 %v215, %v509
      %v511 = vpop.f32.mrb[0].mxu0
      %512 = vmatprep.mubr.f32.mxu0 0.0
      %513 = vmatmul.mubr.f32.gmra.mrb[0].mxu0 %v297
      %v514 = vpop.f32.mrb[0].mxu0
      %v515 = vadd.f32 %v215, %v514
      %v516 = vpop.f32.mrb[0].mxu0
      %517 = vmatprep.mubr.f32.mxu0 0.0
      %518 = vmatmul.mubr.f32.gmra.mrb[0].mxu0 %v300
      %v519 = vpop.f32.mrb[0].mxu0
      %v520 = vadd.f32 %v215, %v519
      %v521 = vpop.f32.mrb[0].mxu0
      %522 = vmatprep.mubr.f32.mxu0 0.0
      %523 = vmatmul.mubr.f32.gmra.mrb[0].mxu0 %v303
      %v524 = vpop.f32.mrb[0].mxu0
      %v525 = vadd.f32 %v215, %v524
      %v526 = vpop.f32.mrb[0].mxu0
      %527 = vmatprep.mubr.f32.mxu0 0.0
      %528 = vmatmul.mubr.f32.gmra.mrb[0].mxu0 %v306
      %v529 = vpop.f32.mrb[0].mxu0
      %v530 = vadd.f32 %v215, %v529
      %v531 = vpop.f32.mrb[0].mxu0
      %532 = vmatprep.mubr.f32.mxu0 0.0
      %533 = vmatmul.mubr.f32.gmra.mrb[0].mxu0 %v309
      %v534 = vpop.f32.mrb[0].mxu0
      %v535 = vadd.f32 %v215, %v534
      %v536 = vpop.f32.mrb[0].mxu0
      %537 = vmatprep.mubr.f32.mxu0 0.0
      %538 = vmatmul.mubr.f32.gmra.mrb[0].mxu0 %v312
      %v539 = vpop.f32.mrb[0].mxu0
      %v540 = vadd.f32 %v215, %v539
      %v541 = vpop.f32.mrb[0].mxu0
      %542 = vdwg.mxu0
      %vm543 = vcmp.ge.f32.partialorder %v385, 0.0
      %vm544 = vcmp.ge.f32.partialorder %v390, 0.0
      %vm545 = vcmp.ge.f32.partialorder %v395, 0.0
      %vm546 = vcmp.ge.f32.partialorder %v400, 0.0
      %vm547 = vcmp.ge.f32.partialorder %v405, 0.0
      %vm548 = vcmp.ge.f32.partialorder %v410, 0.0
      %vm549 = vcmp.ge.f32.partialorder %v415, 0.0
      %vm550 = vcmp.ge.f32.partialorder %v420, 0.0
      %vm551 = vcmp.ge.f32.partialorder %v425, 0.0
      %vm552 = vcmp.ge.f32.partialorder %v430, 0.0
      %vm553 = vcmp.ge.f32.partialorder %v435, 0.0
      %vm554 = vcmp.ge.f32.partialorder %v440, 0.0
      %vm555 = vcmp.ge.f32.partialorder %v445, 0.0
      %vm556 = vcmp.ge.f32.partialorder %v450, 0.0
      %vm557 = vcmp.ge.f32.partialorder %v455, 0.0
      %vm558 = vcmp.ge.f32.partialorder %v460, 0.0
      %vm559 = vcmp.ge.f32.partialorder %v465, 0.0
      %vm560 = vcmp.ge.f32.partialorder %v470, 0.0
      %vm561 = vcmp.ge.f32.partialorder %v475, 0.0
      %vm562 = vcmp.ge.f32.partialorder %v480, 0.0
      %vm563 = vcmp.ge.f32.partialorder %v485, 0.0
      %vm564 = vcmp.ge.f32.partialorder %v490, 0.0
      %vm565 = vcmp.ge.f32.partialorder %v495, 0.0
      %vm566 = vcmp.ge.f32.partialorder %v500, 0.0
      %vm567 = vcmp.ge.f32.partialorder %v505, 0.0
      %vm568 = vcmp.ge.f32.partialorder %v510, 0.0
      %vm569 = vcmp.ge.f32.partialorder %v515, 0.0
      %vm570 = vcmp.ge.f32.partialorder %v520, 0.0
      %vm571 = vcmp.ge.f32.partialorder %v525, 0.0
      %vm572 = vcmp.ge.f32.partialorder %v530, 0.0
      %vm573 = vcmp.ge.f32.partialorder %v535, 0.0
      %vm574 = vcmp.ge.f32.partialorder %v540, 0.0
      %v575 = vmul.f32 %v385, 0.01
      %v576 = vmul.f32 %v390, 0.01
      %v577 = vmul.f32 %v395, 0.01
      %v578 = vmul.f32 %v400, 0.01
      %v579 = vmul.f32 %v405, 0.01
      %v580 = vmul.f32 %v410, 0.01
      %v581 = vmul.f32 %v415, 0.01
      %v582 = vmul.f32 %v420, 0.01
      %v583 = vmul.f32 %v425, 0.01
      %v584 = vmul.f32 %v430, 0.01
      %v585 = vmul.f32 %v435, 0.01
      %v586 = vmul.f32 %v440, 0.01
      %v587 = vmul.f32 %v445, 0.01
      %v588 = vmul.f32 %v450, 0.01
      %v589 = vmul.f32 %v455, 0.01
      %v590 = vmul.f32 %v460, 0.01
      %v591 = vmul.f32 %v465, 0.01
      %v592 = vmul.f32 %v470, 0.01
      %v593 = vmul.f32 %v475, 0.01
      %v594 = vmul.f32 %v480, 0.01
      %v595 = vmul.f32 %v485, 0.01
      %v596 = vmul.f32 %v490, 0.01
      %v597 = vmul.f32 %v495, 0.01
      %v598 = vmul.f32 %v500, 0.01
      %v599 = vmul.f32 %v505, 0.01
      %v600 = vmul.f32 %v510, 0.01
      %v601 = vmul.f32 %v515, 0.01
      %v602 = vmul.f32 %v520, 0.01
      %v603 = vmul.f32 %v525, 0.01
      %v604 = vmul.f32 %v530, 0.01
      %v605 = vmul.f32 %v535, 0.01
      %v606 = vmul.f32 %v540, 0.01
      %v607 = vsel %vm543, %v385, %v575
      %v608 = vsel %vm544, %v390, %v576
      %v609 = vsel %vm545, %v395, %v577
      %v610 = vsel %vm546, %v400, %v578
      %v611 = vsel %vm547, %v405, %v579
      %v612 = vsel %vm548, %v410, %v580
      %v613 = vsel %vm549, %v415, %v581
      %v614 = vsel %vm550, %v420, %v582
      %v615 = vsel %vm551, %v425, %v583
      %v616 = vsel %vm552, %v430, %v584
      %v617 = vsel %vm553, %v435, %v585
      %v618 = vsel %vm554, %v440, %v586
      %v619 = vsel %vm555, %v445, %v587
      %v620 = vsel %vm556, %v450, %v588
      %v621 = vsel %vm557, %v455, %v589
      %v622 = vsel %vm558, %v460, %v590
      %v623 = vsel %vm559, %v465, %v591
      %v624 = vsel %vm560, %v470, %v592
      %v625 = vsel %vm561, %v475, %v593
      %v626 = vsel %vm562, %v480, %v594
      %v627 = vsel %vm563, %v485, %v595
      %v628 = vsel %vm564, %v490, %v596
      %v629 = vsel %vm565, %v495, %v597
      %v630 = vsel %vm566, %v500, %v598
      %v631 = vsel %vm567, %v505, %v599
      %v632 = vsel %vm568, %v510, %v600
      %v633 = vsel %vm569, %v515, %v601
      %v634 = vsel %vm570, %v520, %v602
      %v635 = vsel %vm571, %v525, %v603
      %v636 = vsel %vm572, %v530, %v604
      %v637 = vsel %vm573, %v535, %v605
      %v638 = vsel %vm574, %v540, %v606
      %vm639 = vcmask 523264
      %640 = vst.msk [vmem:[%s172] sm:$0xff] %vm639, %v607
      %641 = vst.msk [vmem:[%s172 + $0x8] sm:$0xff] %vm639, %v608
      %642 = vst.msk [vmem:[%s172 + $0x10] sm:$0xff] %vm639, %v609
      %643 = vst.msk [vmem:[%s172 + $0x18] sm:$0xff] %vm639, %v610
      %644 = vst.msk [vmem:[%s172 + $0x20] sm:$0xff] %vm639, %v611
      %645 = vst.msk [vmem:[%s172 + $0x28] sm:$0xff] %vm639, %v612
      %646 = vst.msk [vmem:[%s172 + $0x30] sm:$0xff] %vm639, %v613
      %647 = vst.msk [vmem:[%s172 + $0x38] sm:$0xff] %vm639, %v614
      %648 = vst.msk [vmem:[%s172 + $0x40] sm:$0xff] %vm639, %v615
      %649 = vst.msk [vmem:[%s172 + $0x48] sm:$0xff] %vm639, %v616
      %650 = vst.msk [vmem:[%s172 + $0x50] sm:$0xff] %vm639, %v617
      %651 = vst.msk [vmem:[%s172 + $0x58] sm:$0xff] %vm639, %v618
      %652 = vst.msk [vmem:[%s172 + $0x60] sm:$0xff] %vm639, %v619
      %653 = vst.msk [vmem:[%s172 + $0x68] sm:$0xff] %vm639, %v620
      %654 = vst.msk [vmem:[%s172 + $0x70] sm:$0xff] %vm639, %v621
      %655 = vst.msk [vmem:[%s172 + $0x78] sm:$0xff] %vm639, %v622
      %656 = vst.msk [vmem:[%s172 + $0x80] sm:$0xff] %vm639, %v623
      %657 = vst.msk [vmem:[%s172 + $0x88] sm:$0xff] %vm639, %v624
      %658 = vst.msk [vmem:[%s172 + $0x90] sm:$0xff] %vm639, %v625
      %659 = vst.msk [vmem:[%s172 + $0x98] sm:$0xff] %vm639, %v626
      %660 = vst.msk [vmem:[%s172 + $0xa0] sm:$0xff] %vm639, %v627
      %661 = vst.msk [vmem:[%s172 + $0xa8] sm:$0xff] %vm639, %v628
      %662 = vst.msk [vmem:[%s172 + $0xb0] sm:$0xff] %vm639, %v629
      %663 = vst.msk [vmem:[%s172 + $0xb8] sm:$0xff] %vm639, %v630
      %664 = vst.msk [vmem:[%s172 + $0xc0] sm:$0xff] %vm639, %v631
      %665 = vst.msk [vmem:[%s172 + $0xc8] sm:$0xff] %vm639, %v632
      %666 = vst.msk [vmem:[%s172 + $0xd0] sm:$0xff] %vm639, %v633
      %667 = vst.msk [vmem:[%s172 + $0xd8] sm:$0xff] %vm639, %v634
      %668 = vst.msk [vmem:[%s172 + $0xe0] sm:$0xff] %vm639, %v635
      %669 = vst.msk [vmem:[%s172 + $0xe8] sm:$0xff] %vm639, %v636
      %670 = vst.msk [vmem:[%s172 + $0xf0] sm:$0xff] %vm639, %v637
      %671 = vst.msk [vmem:[%s172 + $0xf8] sm:$0xff] %vm639, %v638
      %s672 = smul.u32 32, %s14
      %p673 = scmp.lt.s32.totalorder %s672, 63
      %s674 = scalar_select %p673, %s672, 63
      %s675 = smul.addr %s674, 8
      %s676 = scalar_lea.vmem %s3, %s675
      // Predicated region
      $region33: #{tpu_custom_call.1} parent=31 // pred_check
        %p677 = pneg %p100
      $region34: #{tpu_custom_call.1} parent=31 // pred_check_branch
        %679 = sbr.rel (%p677) target = $region36
      $region35: #{tpu_custom_call.1} parent=31 // pred_region
        %s680 = smul.u32 32, %s14
      $region36: #{tpu_custom_call.1} parent=31 // pred_fallthru
        _
    $region32: #{tpu_custom_call.1} parent=5 // pred_fallthru
      _
    %p681 = scmp.le.s32.totalorder 2, %s9
    // Predicated region
    $region37: #{tpu_custom_call.1} parent=5 // pred_check
      %p682 = pneg %p681
    $region38: #{tpu_custom_call.1} parent=5 // pred_check_branch
      %684 = sbr.rel (%p682) target = $region40
    $region39: #{tpu_custom_call.1} parent=5 // pred_region
      %s685 = ssub.s32 %s9, 2
      // Predicated region
      $region41: #{tpu_custom_call.1} parent=39 // pred_check
        %p686 = pneg %p106
      $region42: #{tpu_custom_call.1} parent=39 // pred_check_branch
        %688 = sbr.rel (%p686) target = $region44
      $region43: #{tpu_custom_call.1} parent=39 // pred_region
        %s689 = smul.u32 32, %s15
        %p690 = scmp.lt.s32.totalorder %s689, 63
        %s691 = scalar_select %p690, %s689, 63
        %s692 = smul.addr %s691, 8
        %s693 = scalar_lea.vmem %s3, %s692
      $region44: #{tpu_custom_call.1} parent=39 // pred_fallthru
        _
    $region40: #{tpu_custom_call.1} parent=5 // pred_fallthru
      _
  $region6: #{tpu_custom_call.1} parent=0 // loop_footer
    %s13 = sadd.s32 1, %s9
  $region7: #{tpu_custom_call.1} parent=0 // loop_footer_branch
    %8 = sbr.rel target = $region3
  $region8: #{tpu_custom_call.1} parent=0 // loop_exit
    _

</llo_original>
